<compile_context>
chip_gen: v7x
topology: tpu7x:2x2x1
jax: 0.10.0
libtpu: 0.0.40
codegen_flags: <defaults>
</compile_context>

<pallas_src>
import jax
import jax.numpy as jnp
from jax.experimental import pallas as pl
from jax.experimental.pallas import tpu as pltpu


_LANES = 512          # lane-dense last dim (large multiple of 128)
_MAX_TILE_ROWS = 1024  # (1024, 512) f32 block = 2 MiB
_MIN_TILE_ROWS = 64


def _round_up(x, m):
    return ((x + m - 1) // m) * m


def _choose_tiling(rows):
    """Pick (tile_rows, padded_rows): tile_rows | padded_rows, both multiples of 8."""
    rows8 = _round_up(rows, 8)                 # sublane alignment
    if rows8 <= _MAX_TILE_ROWS:
        return rows8, rows8                    # single tile covers everything
    # Prefer a multiple-of-8 divisor of rows8 so the grid divides with no row pad.
    t = _MAX_TILE_ROWS
    while t >= _MIN_TILE_ROWS and rows8 % t:
        t -= 8
    if t >= _MIN_TILE_ROWS and rows8 % t == 0:
        return t, rows8
    # Pathological row count: pad rows up to a multiple of the max tile.
    return _MAX_TILE_ROWS, _round_up(rows8, _MAX_TILE_ROWS)


def _grid_semantics(grid_len):
    """CORE_PARALLEL on v7x (2 TCs/chip); plain 'parallel' elsewhere."""
    kind = ""
    try:
        kind = jax.devices()[0].device_kind.lower()
    except Exception:
        pass
    if grid_len >= 2 and ("v7" in kind or "7x" in kind):
        return (pltpu.CORE_PARALLEL,)
    return ("parallel",)


def _logreg_kernel(p_ref, x_ref, o_ref):
    # p_ref: SMEM f32[2] = [weight, bias]; x_ref / o_ref: VMEM (tile_r, _LANES)
    w = p_ref[0]
    b = p_ref[1]
    z = x_ref[...] * w + b                     # x @ W.T + b for a 1x1 weight
    # Exact sigmoid: exp goes to the EUP; the divide is free (HBM-bound kernel).
    o_ref[...] = 1.0 / (1.0 + jnp.exp(-z))


def logistic_regression(x, weight, bias):
    """x: (..., 1) f32; weight: (1, 1) f32; bias: (1,) f32 -> sigmoid(x @ W.T + b)."""
    orig_shape = x.shape
    dtype = x.dtype

    # --- wrapper-side lane-dense reshape -------------------------------------
    flat = x.reshape(-1)
    n = flat.shape[0]

    rows = -(-n // _LANES)
    tile_r, rows_padded = _choose_tiling(rows)
    n_padded = rows_padded * _LANES

    if n_padded != n:
        # Ragged tail only: one pad copy.  Divisible shapes (n % (8*_LANES) == 0)
        # take the zero-copy reshape path.
        flat = jnp.pad(flat, (0, n_padded - n))
    slab = flat.reshape(rows_padded, _LANES)

    # weight & bias as SMEM scalars.
    params = jnp.concatenate(
        [weight.reshape(-1), bias.reshape(-1)]).astype(jnp.float32)  # f32[2]

    grid_r = rows_padded // tile_r
    n_items = rows_padded * _LANES
    itemsize = jnp.dtype(dtype).itemsize
    cost = pl.CostEstimate(
        flops=5 * n_items,                 # fma + neg + add + div (rough)
        transcendentals=n_items,           # exp
        bytes_accessed=2 * n_items * itemsize,
    )

    out = pl.pallas_call(
        _logreg_kernel,
        out_shape=jax.ShapeDtypeStruct((rows_padded, _LANES), dtype),
        grid=(grid_r,),
        in_specs=[
            pl.BlockSpec(memory_space=pltpu.MemorySpace.SMEM),   # [w, b] scalars
            pl.BlockSpec((tile_r, _LANES), lambda i: (i, 0)),    # x tiles
        ],
        out_specs=pl.BlockSpec((tile_r, _LANES), lambda i: (i, 0)),
        compiler_params=pltpu.CompilerParams(
            dimension_semantics=_grid_semantics(grid_r),
            vmem_limit_bytes=32 * 1024 * 1024,   # >= 4x 2 MiB double-buffered blocks
        ),
        cost_estimate=cost,
    )(params, slab)

    # Restore the original (B, 1) layout (trim only if we padded).
    if n_padded != n:
        return out.reshape(-1)[:n].reshape(orig_shape)
    return out.reshape(orig_shape)


if __name__ == "__main__":
    key = jax.random.PRNGKey(0)
    kx, kw, kb = jax.random.split(key, 3)

    # Deterministic parameter init, mimicking nn.Linear(1, 1) default
    # (uniform in [-1/sqrt(in_features), 1/sqrt(in_features)] = [-1, 1]).
    weight = jax.random.uniform(kw, (1, 1), jnp.float32, minval=-1.0, maxval=1.0)
    bias = jax.random.uniform(kb, (1,), jnp.float32, minval=-1.0, maxval=1.0)

    # Small example input consistent with the forward: batch=8, features=1.
    x = jax.random.normal(kx, (8, 1), jnp.float32)

    y = logistic_regression(x, weight, bias)
    jax.block_until_ready(y)

    # Reference check in plain JAX (exact sigmoid path -> tight tolerance).
    y_ref = jax.nn.sigmoid(x @ weight.T + bias)
    assert y.shape == y_ref.shape, (y.shape, y_ref.shape)
    assert jnp.allclose(y, y_ref, atol=1e-5, rtol=1e-5), (y, y_ref)

    print("KERNEL_OK")
</pallas_src>

<mosaic_0001>
module attributes {stable_mosaic.version = 11 : i64} {
  func.func @_logreg_kernel(%arg0: i32, %arg1: memref<2xf32, #tpu.memory_space<smem>>, %arg2: memref<8x512xf32, #tpu.memory_space<vmem>>, %arg3: memref<8x512xf32, #tpu.memory_space<vmem>>) attributes {dimension_semantics = [#tpu.dimension_semantics<parallel>], iteration_bounds = array<i64: 1>, scalar_prefetch = 0 : i64, scratch_operands = 0 : i64, tpu.core_type = #tpu.core_type<tc>, window_params = [{transform_indices = @transform_0, window_bounds = array<i64: 2>}, {transform_indices = @transform_1, window_bounds = array<i64: 8, 512>}, {transform_indices = @transform_2, window_bounds = array<i64: 8, 512>}]} {
    %c0 = arith.constant 0 : index
    %0 = memref.load %arg1[%c0] : memref<2xf32, #tpu.memory_space<smem>>
    %c1 = arith.constant 1 : index
    %1 = memref.load %arg1[%c1] : memref<2xf32, #tpu.memory_space<smem>>
    %c0_0 = arith.constant 0 : index
    %c0_1 = arith.constant 0 : index
    %2 = vector.load %arg2[%c0_0, %c0_1] : memref<8x512xf32, #tpu.memory_space<vmem>>, vector<8x512xf32>
    %3 = vector.broadcast %0 : f32 to vector<8x512xf32>
    %4 = arith.mulf %2, %3 : vector<8x512xf32>
    %5 = vector.broadcast %1 : f32 to vector<8x512xf32>
    %6 = arith.addf %4, %5 : vector<8x512xf32>
    %cst = arith.constant 0.000000e+00 : f32
    %7 = vector.broadcast %cst : f32 to vector<8x512xf32>
    %8 = arith.subf %7, %6 : vector<8x512xf32>
    %9 = math.exp %8 : vector<8x512xf32>
    %cst_2 = arith.constant 1.000000e+00 : f32
    %10 = vector.broadcast %cst_2 : f32 to vector<8x512xf32>
    %11 = arith.addf %10, %9 : vector<8x512xf32>
    %cst_3 = arith.constant 1.000000e+00 : f32
    %12 = vector.broadcast %cst_3 : f32 to vector<8x512xf32>
    %13 = arith.divf %12, %11 : vector<8x512xf32>
    %c0_4 = arith.constant 0 : index
    %c0_5 = arith.constant 0 : index
    %14 = vector.load %arg3[%c0_4, %c0_5] : memref<8x512xf32, #tpu.memory_space<vmem>>, vector<8x512xf32>
    tpu.vector_store %arg3[%c0_4, %c0_5], %13 {strides = array<i32>} : memref<8x512xf32, #tpu.memory_space<vmem>>, vector<8x512xf32>,
    return
  }
  func.func @transform_0(%arg0: i32) -> i32 {
    %c0_i32 = arith.constant 0 : i32
    %c0_i32_0 = arith.constant 0 : i32
    return %c0_i32 : i32
  }
  func.func @transform_1(%arg0: i32) -> (i32, i32) {
    %c0_i32 = arith.constant 0 : i32
    %c0_i32_0 = arith.constant 0 : i32
    return %arg0, %c0_i32 : i32, i32
  }
  func.func @transform_2(%arg0: i32) -> (i32, i32) {
    %c0_i32 = arith.constant 0 : i32
    %c0_i32_0 = arith.constant 0 : i32
    return %arg0, %c0_i32 : i32, i32
  }
}

</mosaic_0001>

<llo_original>
// kernel: tpu_custom_call.1
$region0: #{tpu_custom_call.1}
  #allocation0 [shape = 'u32[]', space=smem, size = 0x4, offset = 0x4, fixed_abs, tag = 'smem constant byte address 0x4 - core index']
  #allocation1 [shape = 'u32[144,128]{1,0:T(1,128)}', space=vmem, size = 0x12000, scoped, tag = 'internal scratch']
  %s0 = inlined_call_operand.hbm [shape: f32[2], index: 0, kind: input, shape index: {}]
  %s1 = inlined_call_operand.hbm [shape: f32[8,512], index: 1, kind: input, shape index: {}]
  %s2 = inlined_call_operand.hbm [shape: f32[8,512], index: 2, kind: output, shape index: {}]
  %s3 = sld [smem:[#allocation0]]
  $region26: #{tpu_custom_call.1} parent=0
    _
  %s5 = ssub.s32 1, %s3
  %s6 = scalar_select 0, %s5, %s3
  $region1: #{tpu_custom_call.1} parent=0
    #allocation2 [shape = 'u8[512]{0}', space=smem, size = 0x200, scoped, tag = 'input window, operand 0, single buffered']
    #allocation3 [shape = 's32[1]{0}', space=sflag, size = 0x4, scoped, tag = 'scoped memory for tpu_custom_call.1']
    #allocation4 [shape = 's32[1]{0}', space=sflag, size = 0x4, scoped, tag = 'scoped memory for tpu_custom_call.1']
    #allocation5 [shape = 's32[1]{0}', space=sflag, size = 0x4, scoped, tag = 'scoped memory for tpu_custom_call.1']
    #allocation6 [shape = 'u8[16384]{0}', space=vmem, size = 0x4000, scoped, tag = 'input window, operand 1, single buffered']
    #allocation7 [shape = 'u8[16384]{0}', space=vmem, size = 0x4000, scoped, tag = 'output window, operand 0, single buffered']
    %7 = vsyncpa [#allocation5], 0
    %8 = vsyncpa [#allocation3], 0
    %9 = vsyncpa [#allocation4], 0
    // Predicated region
    $region2: #{tpu_custom_call.1} parent=1 // pred_check
      _
    $region3: #{tpu_custom_call.1} parent=1 // pred_check_branch
      %11 = sbr.rel (0) target = $region5
    $region4: #{tpu_custom_call.1} parent=1 // pred_region
      %s13 = ssub.s32 16, 16
      %14 = vsyncadd [#allocation5], %s13
      %17 = dma.hbm_to_smem %s0, 16, [#allocation2], [#allocation5]
    $region5: #{tpu_custom_call.1} parent=1 // pred_fallthru
      _
    // Predicated region
    $region6: #{tpu_custom_call.1} parent=1 // pred_check
      _
    $region7: #{tpu_custom_call.1} parent=1 // pred_check_branch
      %19 = sbr.rel (0) target = $region9
    $region8: #{tpu_custom_call.1} parent=1 // pred_region
      %s21 = ssub.s32 512, 512
      %22 = vsyncadd [#allocation3], %s21
      %s24 = sshll.u32 [#allocation6], 4
      %s25 = int_to_ptr.vmem [resolvable:$true] %s24
      %27 = dma.hbm_to_vmem [thread:$0]  %s1, 512, %s25, [#allocation3]
    $region9: #{tpu_custom_call.1} parent=1 // pred_fallthru
      _
    // Predicated region
    $region10: #{tpu_custom_call.1} parent=1 // pred_check
      _
    $region11: #{tpu_custom_call.1} parent=1 // pred_check_branch
      %29 = sbr.rel (0) target = $region13
    $region12: #{tpu_custom_call.1} parent=1 // pred_region
      %30 = dma.done [#allocation5], 16
    $region13: #{tpu_custom_call.1} parent=1 // pred_fallthru
      _
    // Predicated region
    $region14: #{tpu_custom_call.1} parent=1 // pred_check
      _
    $region15: #{tpu_custom_call.1} parent=1 // pred_check_branch
      %32 = sbr.rel (0) target = $region17
    $region16: #{tpu_custom_call.1} parent=1 // pred_region
      %33 = dma.done [#allocation3], 512
    $region17: #{tpu_custom_call.1} parent=1 // pred_fallthru
      _
    %34 = sfence
    %s35 = sld [smem:[#allocation2]]
    %s36 = sld [smem:[#allocation2 + $0x1]]
    %v37 = vld [vmem:[#allocation6] sm:$0xff]
    %v38 = vld [vmem:[#allocation6 + $0x8] sm:$0xff]
    %v39 = vld [vmem:[#allocation6 + $0x10] sm:$0xff]
    %v40 = vld [vmem:[#allocation6 + $0x18] sm:$0xff]
    %v41 = vstv %s35
    %v42 = vmul.f32 %v37, %v41
    %v43 = vmul.f32 %v38, %v41
    %v44 = vmul.f32 %v39, %v41
    %v45 = vmul.f32 %v40, %v41
    %v46 = vstv %s36
    %v47 = vadd.f32 %v42, %v46
    %v48 = vadd.f32 %v43, %v46
    %v49 = vadd.f32 %v44, %v46
    %v50 = vadd.f32 %v45, %v46
    %v51 = vsub.f32 0.0, %v47
    %v52 = vsub.f32 0.0, %v48
    %v53 = vsub.f32 0.0, %v49
    %v54 = vsub.f32 0.0, %v50
    %v55 = vmul.f32 %v51, 1.442695
    %v56 = vpow.pop %v55
    %v57 = vmul.f32 %v52, 1.442695
    %v58 = vpow.pop %v57
    %v59 = vmul.f32 %v53, 1.442695
    %v60 = vpow.pop %v59
    %v61 = vmul.f32 %v54, 1.442695
    %v62 = vpow.pop %v61
    %v63 = vadd.f32 %v56, 1.0
    %v64 = vadd.f32 %v58, 1.0
    %v65 = vadd.f32 %v60, 1.0
    %v66 = vadd.f32 %v62, 1.0
    %v67 = vrcp.pop %v63
    %v68 = vmul.f32 1.0, %v67
    %v69 = vrcp.pop %v64
    %v70 = vmul.f32 1.0, %v69
    %v71 = vrcp.pop %v65
    %v72 = vmul.f32 1.0, %v71
    %v73 = vrcp.pop %v66
    %v74 = vmul.f32 1.0, %v73
    %75 = vst [vmem:[#allocation7] sm:$0xff] %v68
    %76 = vst [vmem:[#allocation7 + $0x8] sm:$0xff] %v70
    %77 = vst [vmem:[#allocation7 + $0x10] sm:$0xff] %v72
    %78 = vst [vmem:[#allocation7 + $0x18] sm:$0xff] %v74
    // Predicated region
    $region18: #{tpu_custom_call.1} parent=1 // pred_check
      _
    $region19: #{tpu_custom_call.1} parent=1 // pred_check_branch
      %80 = sbr.rel (0) target = $region21
    $region20: #{tpu_custom_call.1} parent=1 // pred_region
      %s82 = ssub.s32 512, 512
      %83 = vsyncadd [#allocation4], %s82
      %s85 = sshll.u32 [#allocation7], 4
      %s86 = int_to_ptr.vmem [resolvable:$true] %s85
      %88 = dma.vmem_to_hbm [thread:$0]  %s86, 512, %s2, [#allocation4]
    $region21: #{tpu_custom_call.1} parent=1 // pred_fallthru
      _
    // Predicated region
    $region22: #{tpu_custom_call.1} parent=1 // pred_check
      _
    $region23: #{tpu_custom_call.1} parent=1 // pred_check_branch
      %90 = sbr.rel (0) target = $region25
    $region24: #{tpu_custom_call.1} parent=1 // pred_region
      %91 = dma.done [#allocation4], 512
    $region25: #{tpu_custom_call.1} parent=1 // pred_fallthru
      _
    %92 = vsyncpa [#allocation3], 1
    %93 = vsyncpa [#allocation4], 1
    %94 = vsyncpa [#allocation5], 1

</llo_original>
